<compile_context>
chip_gen: v7x
topology: tpu7x:2x2x1
jax: 0.10.0
libtpu: 0.0.40
codegen_flags: <defaults>
</compile_context>

<pallas_src>
import functools

import jax
import jax.numpy as jnp
from jax.experimental import pallas as pl
from jax.experimental.pallas import tpu as pltpu


def _snn_ce_kernel(x_ref, tgt_ref, out_ref, acc_ref, *, inv_t):
    """Grid = (batch_blocks, time_blocks); time is the (last, 'arbitrary') reduction axis.

    x_ref   : [TB, TT, C]  native dtype (bf16/f32) input tile
    tgt_ref : [TB, C]      f32 one-hot targets for this batch block
    out_ref : [TB, 1]      f32 per-example loss (written once, at last time step)
    acc_ref : [TB, C]      f32 VMEM scratch, running sum over time
    """
    ti = pl.program_id(1)

    @pl.when(ti == 0)
    def _init():
        acc_ref[...] = jnp.zeros_like(acc_ref)

    # Stream native dtype, accumulate in f32.
    acc_ref[...] += jnp.sum(x_ref[...].astype(jnp.float32), axis=1)

    @pl.when(ti == pl.num_programs(1) - 1)
    def _finalize():
        logits = acc_ref[...] * inv_t                                   # [TB, C]
        m = jnp.max(logits, axis=-1, keepdims=True)                      # [TB, 1]
        lse = jnp.log(jnp.sum(jnp.exp(logits - m), axis=-1, keepdims=True)) + m
        tgt_logit = jnp.sum(logits * tgt_ref[...], axis=-1, keepdims=True)
        out_ref[...] = lse - tgt_logit                                   # [TB, 1]


def _vmem_capacity_bytes():
    try:
        return int(pltpu.get_tpu_info().vmem_capacity_bytes)
    except Exception:
        return 64 << 20  # conservative (v7x per-TC)


def _aligned_divisors(n, align):
    return [d for d in range(align, n + 1, align) if n % d == 0]


def snn_loss_wrapper(x, target, *, block_b=None, block_t=None):
    """x: [B, T, C] float (bf16/f32), target: [B] int32 -> scalar f32 loss."""
    B, T, C = x.shape
    itemsize = x.dtype.itemsize

    vmem_cap = _vmem_capacity_bytes()
    budget = vmem_cap // 8  # per-stream tile budget, generation-aware, with headroom

    # --- tile selection (last two block dims must be mult-of-8 / full-dim) ---
    if block_t is None:
        tt_opts = [d for d in _aligned_divisors(T, 8)
                   if 2 * 8 * d * C * itemsize <= budget]
        block_t = max(tt_opts) if tt_opts else T
    if block_b is None:
        tb_opts = _aligned_divisors(B, 8)
        fits = [d for d in tb_opts if 2 * d * block_t * C * itemsize <= budget]
        if fits:
            block_b = max(fits)
        elif tb_opts:
            block_b = min(tb_opts)
        else:
            block_b = B
    assert B % block_b == 0 and T % block_t == 0, (B, T, block_b, block_t)
    nb, nt = B // block_b, T // block_t

    # glue: integer labels -> one-hot f32 (tiny vs. the [B,T,C] stream)
    tgt_onehot = jax.nn.one_hot(target, C, dtype=jnp.float32)            # [B, C]

    # explicit VMEM limit with headroom (double-buffered x + one-hot + scratch + out)
    est_vmem = (2 * block_b * block_t * C * itemsize
                + 2 * block_b * C * 4
                + block_b * C * 4
                + 2 * block_b * 4)
    vmem_limit = int(min(vmem_cap * 3 // 4, max(4 * est_vmem, 32 << 20)))

    cost = pl.CostEstimate(
        flops=B * T * C + 6 * B * C,
        transcendentals=B * C + B,
        bytes_accessed=B * T * C * itemsize + B * C * 4 + B * 4,
    )

    kernel = functools.partial(_snn_ce_kernel, inv_t=1.0 / T)

    per_example = pl.pallas_call(
        kernel,
        out_shape=jax.ShapeDtypeStruct((B, 1), jnp.float32),
        grid_spec=pltpu.PrefetchScalarGridSpec(
            num_scalar_prefetch=0,
            grid=(nb, nt),                                   # reduction (time) axis last
            in_specs=[
                pl.BlockSpec((block_b, block_t, C), lambda bi, ti: (bi, ti, 0)),
                pl.BlockSpec((block_b, C), lambda bi, ti: (bi, 0)),
            ],
            out_specs=pl.BlockSpec((block_b, 1), lambda bi, ti: (bi, 0)),
            scratch_shapes=[pltpu.VMEM((block_b, C), jnp.float32)],
        ),
        compiler_params=pltpu.CompilerParams(
            dimension_semantics=("parallel", "arbitrary"),
            vmem_limit_bytes=vmem_limit,
        ),
        cost_estimate=cost,
    )(x, tgt_onehot)

    # batch-mean reduction (1/B) on a tiny [B, 1] array
    return jnp.mean(per_example)


def snn_loss_reference(x, target):
    """Pure-JAX reference: CrossEntropyLoss()(x.mean(1), target), computed in f32."""
    logits = jnp.mean(x.astype(jnp.float32), axis=1)
    logp = jax.nn.log_softmax(logits, axis=-1)
    return -jnp.mean(jnp.take_along_axis(logp, target[:, None], axis=-1))


if __name__ == "__main__":
    key = jax.random.PRNGKey(0)
    k1, k2, k3, k4 = jax.random.split(key, 4)

    # Case 1: small f32 input, auto tiling (SNN-style: batch=2, time=8, classes=32).
    B, T, C = 2, 8, 32
    x = jax.random.normal(k1, (B, T, C), dtype=jnp.float32)
    target = jax.random.randint(k2, (B,), 0, C, dtype=jnp.int32)
    loss = jax.block_until_ready(snn_loss_wrapper(x, target))
    ref = snn_loss_reference(x, target)
    assert jnp.allclose(loss, ref, atol=1e-5, rtol=1e-5), (loss, ref)

    # Case 2: bf16 input streamed natively + forced multi-block grid to exercise
    # the pipelined time-accumulator / finalize path (grid = (2, 3)).
    B2, T2, C2 = 16, 24, 32
    x2 = jax.random.normal(k3, (B2, T2, C2), dtype=jnp.bfloat16)
    target2 = jax.random.randint(k4, (B2,), 0, C2, dtype=jnp.int32)
    loss2 = jax.block_until_ready(
        snn_loss_wrapper(x2, target2, block_b=8, block_t=8))
    ref2 = snn_loss_reference(x2, target2)
    assert jnp.allclose(loss2, ref2, atol=1e-3, rtol=1e-3), (loss2, ref2)

    print("KERNEL_OK")
</pallas_src>

<mosaic_0001>
module attributes {stable_mosaic.version = 11 : i64} {
  func.func @_snn_ce_kernel(%arg0: i32, %arg1: i32, %arg2: memref<2x8x32xf32, #tpu.memory_space<vmem>>, %arg3: memref<2x32xf32, #tpu.memory_space<vmem>>, %arg4: memref<2x1xf32, #tpu.memory_space<vmem>>, %arg5: memref<2x32xf32, #tpu.memory_space<vmem>>) attributes {dimension_semantics = [#tpu.dimension_semantics<parallel>, #tpu.dimension_semantics<arbitrary>], iteration_bounds = array<i64: 1, 1>, scalar_prefetch = 0 : i64, scratch_operands = 1 : i64, tpu.core_type = #tpu.core_type<tc>, window_params = [{transform_indices = @transform_0, window_bounds = array<i64: 2, 8, 32>}, {transform_indices = @transform_1, window_bounds = array<i64: 2, 32>}, {transform_indices = @transform_2, window_bounds = array<i64: 2, 1>}]} {
    %c0_i32 = arith.constant 0 : i32
    %0 = arith.cmpi eq, %arg1, %c0_i32 : i32
    %1 = arith.extui %0 : i1 to i32
    %c0_i32_0 = arith.constant 0 : i32
    %2 = arith.cmpi ne, %1, %c0_i32_0 : i32
    scf.if %2 {
      %cst_9 = arith.constant 0.000000e+00 : f32
      %11 = vector.broadcast %cst_9 : f32 to vector<2x32xf32>
      %c0_10 = arith.constant 0 : index
      %c0_11 = arith.constant 0 : index
      %12 = vector.load %arg5[%c0_10, %c0_11] : memref<2x32xf32, #tpu.memory_space<vmem>>, vector<2x32xf32>
      tpu.vector_store %arg5[%c0_10, %c0_11], %11 {strides = array<i32>} : memref<2x32xf32, #tpu.memory_space<vmem>>, vector<2x32xf32>,
    } else {
    }
    %c0 = arith.constant 0 : index
    %c0_1 = arith.constant 0 : index
    %3 = vector.load %arg5[%c0, %c0_1] : memref<2x32xf32, #tpu.memory_space<vmem>>, vector<2x32xf32>
    %c0_2 = arith.constant 0 : index
    %c0_3 = arith.constant 0 : index
    %c0_4 = arith.constant 0 : index
    %4 = vector.load %arg2[%c0_2, %c0_3, %c0_4] : memref<2x8x32xf32, #tpu.memory_space<vmem>>, vector<2x8x32xf32>
    %cst = arith.constant dense<0.000000e+00> : vector<2x32xf32>
    %5 = vector.multi_reduction <add>, %4, %cst [1] : vector<2x8x32xf32> to vector<2x32xf32>
    %6 = arith.addf %3, %5 : vector<2x32xf32>
    %c0_5 = arith.constant 0 : index
    %c0_6 = arith.constant 0 : index
    %7 = vector.load %arg5[%c0_5, %c0_6] : memref<2x32xf32, #tpu.memory_space<vmem>>, vector<2x32xf32>
    tpu.vector_store %arg5[%c0_5, %c0_6], %6 {strides = array<i32>} : memref<2x32xf32, #tpu.memory_space<vmem>>, vector<2x32xf32>,
    %c0_i32_7 = arith.constant 0 : i32
    %8 = arith.cmpi eq, %arg1, %c0_i32_7 : i32
    %9 = arith.extui %8 : i1 to i32
    %c0_i32_8 = arith.constant 0 : i32
    %10 = arith.cmpi ne, %9, %c0_i32_8 : i32
    scf.if %10 {
      %c0_9 = arith.constant 0 : index
      %c0_10 = arith.constant 0 : index
      %11 = vector.load %arg5[%c0_9, %c0_10] : memref<2x32xf32, #tpu.memory_space<vmem>>, vector<2x32xf32>
      %cst_11 = arith.constant 1.250000e-01 : f32
      %12 = vector.broadcast %cst_11 : f32 to vector<2x32xf32>
      %13 = arith.mulf %11, %12 : vector<2x32xf32>
      %cst_12 = arith.constant dense<0xFF800000> : vector<2xf32>
      %14 = vector.multi_reduction <maximumf>, %13, %cst_12 [1] : vector<2x32xf32> to vector<2xf32>
      %15 = vector.shape_cast %14 : vector<2xf32> to vector<2x1xf32>
      %16 = vector.broadcast %15 : vector<2x1xf32> to vector<2x32xf32>
      %17 = arith.subf %13, %16 : vector<2x32xf32>
      %18 = math.exp %17 : vector<2x32xf32>
      %cst_13 = arith.constant dense<0.000000e+00> : vector<2xf32>
      %19 = vector.multi_reduction <add>, %18, %cst_13 [1] : vector<2x32xf32> to vector<2xf32>
      %20 = vector.shape_cast %19 : vector<2xf32> to vector<2x1xf32>
      %21 = math.log %20 : vector<2x1xf32>
      %22 = arith.addf %21, %15 : vector<2x1xf32>
      %c0_14 = arith.constant 0 : index
      %c0_15 = arith.constant 0 : index
      %23 = vector.load %arg3[%c0_14, %c0_15] : memref<2x32xf32, #tpu.memory_space<vmem>>, vector<2x32xf32>
      %24 = arith.mulf %13, %23 : vector<2x32xf32>
      %cst_16 = arith.constant dense<0.000000e+00> : vector<2xf32>
      %25 = vector.multi_reduction <add>, %24, %cst_16 [1] : vector<2x32xf32> to vector<2xf32>
      %26 = vector.shape_cast %25 : vector<2xf32> to vector<2x1xf32>
      %27 = arith.subf %22, %26 : vector<2x1xf32>
      %c0_17 = arith.constant 0 : index
      %c0_18 = arith.constant 0 : index
      %28 = vector.load %arg4[%c0_17, %c0_18] : memref<2x1xf32, #tpu.memory_space<vmem>>, vector<2x1xf32>
      tpu.vector_store %arg4[%c0_17, %c0_18], %27 {strides = array<i32>} : memref<2x1xf32, #tpu.memory_space<vmem>>, vector<2x1xf32>,
    } else {
    }
    return
  }
  func.func @transform_0(%arg0: i32, %arg1: i32) -> (i32, i32, i32) {
    %c0_i32 = arith.constant 0 : i32
    %c0_i32_0 = arith.constant 0 : i32
    return %arg0, %arg1, %c0_i32 : i32, i32, i32
  }
  func.func @transform_1(%arg0: i32, %arg1: i32) -> (i32, i32) {
    %c0_i32 = arith.constant 0 : i32
    %c0_i32_0 = arith.constant 0 : i32
    return %arg0, %c0_i32 : i32, i32
  }
  func.func @transform_2(%arg0: i32, %arg1: i32) -> (i32, i32) {
    %c0_i32 = arith.constant 0 : i32
    %c0_i32_0 = arith.constant 0 : i32
    return %arg0, %c0_i32 : i32, i32
  }
}

</mosaic_0001>

<llo_original>
// kernel: tpu_custom_call.1
$region0: #{tpu_custom_call.1}
  #allocation0 [shape = 'u32[]', space=smem, size = 0x4, offset = 0x4, fixed_abs, tag = 'smem constant byte address 0x4 - core index']
  #allocation1 [shape = 'u32[144,128]{1,0:T(1,128)}', space=vmem, size = 0x12000, scoped, tag = 'internal scratch']
  #allocation2 [shape = 'f32[2,32]{1,0:T(2,128)}', space=vmem, size = 0x400, scoped, tag = 'scratch operand']
  %s0 = inlined_call_operand.hbm [shape: f32[2,8,32], index: 0, kind: input, shape index: {}]
  %s1 = inlined_call_operand.vmem [shape: f32[2,32], index: 1, kind: input, shape index: {}]
  %s2 = inlined_call_operand.vmem [shape: f32[2,1], index: 2, kind: output, shape index: {}]
  %s3 = sld [smem:[#allocation0]]
  $region30: #{tpu_custom_call.1} parent=0
    _
  %s5 = ssub.s32 1, %s3
  %s6 = scalar_select 0, %s5, %s3
  $region1: #{tpu_custom_call.1} parent=0
    #allocation3 [shape = 'u8[8192]{0}', space=vmem, size = 0x2000, scoped, tag = 'input window, operand 0, single buffered']
    #allocation4 [shape = 's32[1]{0}', space=sflag, size = 0x4, scoped, tag = 'scoped memory for tpu_custom_call.1']
    %7 = vsyncpa [#allocation4], 0
    // Predicated region
    $region2: #{tpu_custom_call.1} parent=1 // pred_check
      _
    $region3: #{tpu_custom_call.1} parent=1 // pred_check_branch
      %9 = sbr.rel (0) target = $region5
    $region4: #{tpu_custom_call.1} parent=1 // pred_region
      %s11 = ssub.s32 256, 256
      %12 = vsyncadd [#allocation4], %s11
      %s13 = sshll.u32 [#allocation3], 4
      %s14 = int_to_ptr.vmem [resolvable:$true] %s13
      %19 = dma.hbm_to_vmem [thread:$0]  %s0, 256, %s14, [#allocation4], 128, 128, 8
    $region5: #{tpu_custom_call.1} parent=1 // pred_fallthru
      _
    // Predicated region
    $region6: #{tpu_custom_call.1} parent=1 // pred_check
      _
    $region7: #{tpu_custom_call.1} parent=1 // pred_check_branch
      %21 = sbr.rel (0) target = $region9
    $region8: #{tpu_custom_call.1} parent=1 // pred_region
      _
    $region9: #{tpu_custom_call.1} parent=1 // pred_fallthru
      _
    // Predicated region
    $region10: #{tpu_custom_call.1} parent=1 // pred_check
      _
    $region11: #{tpu_custom_call.1} parent=1 // pred_check_branch
      %23 = sbr.rel (0) target = $region13
    $region12: #{tpu_custom_call.1} parent=1 // pred_region
      %24 = dma.done [#allocation4], 256
    $region13: #{tpu_custom_call.1} parent=1 // pred_fallthru
      _
    %p25 = scmp.eq.s32.totalorder 0, 0
    // Predicated region
    $region14: #{tpu_custom_call.1} parent=1 // pred_check
      %p26 = pneg %p25
    $region15: #{tpu_custom_call.1} parent=1 // pred_check_branch
      %28 = sbr.rel (%p26) target = $region17
    $region16: #{tpu_custom_call.1} parent=1 // pred_region
      %vm29 = vcmask 254976
      %30 = vst.msk [vmem:[#allocation2] sm:$0x3] %vm29, 0.0
    $region17: #{tpu_custom_call.1} parent=1 // pred_fallthru
      _
    %v31 = vld [vmem:[#allocation2] sm:$0x3]
    %v32 = vld [vmem:[#allocation3] sm:$0xff]
    %v33 = vld [vmem:[#allocation3 + $0x8] sm:$0xff]
    %vm34 = vcmask 261120
    %v35 = vsel %vm34, %v32, 0.0
    %v36 = vrot.slane %v35, 4
    %v37 = vadd.f32 %v35, %v36
    %v38 = vrot.slane %v37, 2
    %v39 = vadd.f32 %v37, %v38
    %v40 = vrot.slane %v39, 1
    %v41 = vadd.f32 %v39, %v40
    %v42 = vsel %vm34, %v33, 0.0
    %v43 = vrot.slane %v42, 4
    %v44 = vadd.f32 %v42, %v43
    %v45 = vrot.slane %v44, 2
    %v46 = vadd.f32 %v44, %v45
    %v47 = vrot.slane %v46, 1
    %v48 = vadd.f32 %v46, %v47
    %vm51 = vcmask 1041409
    %v52 = vsel %vm51, %v48, %v41
    %v54 = vadd.f32 %v31, %v52
    %vm55 = vcmask 254976
    %56 = vst.msk [vmem:[#allocation2] sm:$0x3] %vm55, %v54
    // Predicated region
    $region18: #{tpu_custom_call.1} parent=1 // pred_check
      %p57 = pneg %p25
    $region19: #{tpu_custom_call.1} parent=1 // pred_check_branch
      %59 = sbr.rel (%p57) target = $region21
    $region20: #{tpu_custom_call.1} parent=1 // pred_region
      %v60 = vld [vmem:[#allocation2] sm:$0x3]
      %v61 = vmul.f32 %v60, 0.125
      %v62 = vsel %vm55, %v61, -inf
      %63 = vmax.xlane.f32.xlu0 %v62
      %v64 = vpop.xlane.xlu0 %63
      %v65 = vsub.f32 %v61, %v64
      %v66 = vmul.f32 %v65, 1.442695
      %v67 = vpow.pop %v66
      %v68 = vsel %vm55, %v67, 0.0
      %69 = vadd.xlane.f32.xlu0 %v68
      %v70 = vpop.xlane.xlu0 %69
      %v71 = vlog2.pop %v70
      %v72 = vmul.f32 %v71, 0.6931472
      %v73 = vadd.f32 %v72, %v64
      %v74 = vld [vmem:[%s1] sm:$0x3]
      %v75 = vmul.f32 %v61, %v74
      %v76 = vsel %vm55, %v75, 0.0
      %77 = vadd.xlane.f32.xlu0 %v76
      %v78 = vpop.xlane.xlu0 %77
      %v79 = vsub.f32 %v73, %v78
      %vm80 = vcmask 1024
      %81 = vst.msk [vmem:[%s2] sm:$0x3] %vm80, %v79
    $region21: #{tpu_custom_call.1} parent=1 // pred_fallthru
      _
    // Predicated region
    $region22: #{tpu_custom_call.1} parent=1 // pred_check
      _
    $region23: #{tpu_custom_call.1} parent=1 // pred_check_branch
      %83 = sbr.rel (0) target = $region25
    $region24: #{tpu_custom_call.1} parent=1 // pred_region
      _
    $region25: #{tpu_custom_call.1} parent=1 // pred_fallthru
      _
    // Predicated region
    $region26: #{tpu_custom_call.1} parent=1 // pred_check
      _
    $region27: #{tpu_custom_call.1} parent=1 // pred_check_branch
      %85 = sbr.rel (0) target = $region29
    $region28: #{tpu_custom_call.1} parent=1 // pred_region
      _
    $region29: #{tpu_custom_call.1} parent=1 // pred_fallthru
      _
    %86 = vsyncpa [#allocation4], 1

</llo_original>
